<compile_context>
chip_gen: v7x
topology: tpu7x:2x2x1
jax: 0.10.0
libtpu: 0.0.40
codegen_flags: <defaults>
</compile_context>

<pallas_src>
import functools

import jax
import jax.numpy as jnp
from jax import lax
from jax.experimental import pallas as pl
from jax.experimental.pallas import tpu as pltpu

K_SIZE = 4
STRIDE = 2
PAD = 1
EPS = 1e-5  # nn.InstanceNorm2d default eps (affine=False, biased variance)

# Phase decomposition of ConvTranspose2d(k=4, s=2, p=1):
# output pixel (2h+pi, 2w+pj) = 2x2 window of the 1-padded input at rows
# {h+pi, h+pi+1}, cols {w+pj, w+pj+1}, with kernel taps
#   kh = _KMAP[pi][dh], kw = _KMAP[pj][dw],  dh, dw in {0, 1}.
_KMAP = ((3, 1), (2, 0))
_TAPS = ((0, 0), (0, 1), (1, 0), (1, 1))   # (dh, dw) order shared by host & kernel


def _unet_up_kernel(x_ref, w_ref, o_ref, *, w_pad, w_valid, h):
    """One (sample, C_out-block) grid step; full spatial extent per step.

    x_ref : (1, C_in, P)          bf16 - padded input, lane-flat, row width w_pad.
    w_ref : (4, C_out_t, 4*C_in)  bf16 - per-phase tap-concatenated weights.
    o_ref : (1, 4, C_out_t, L)    f32  - per-phase output, L = h * w_pad lanes.
    """
    c_out_t = o_ref.shape[2]
    L = o_ref.shape[3]                       # = h * w_pad (2 junk cols per row)

    # Lane-validity mask: lane p -> column p % w_pad; columns >= w_valid are the
    # junk tail of each padded row and are excluded from the statistics.
    col = lax.broadcasted_iota(jnp.int32, (1, L), 1) % w_pad
    mask = (col < w_valid).astype(jnp.float32)          # (1, L)

    # Lane-partial statistics (plain VPU adds); one cross-lane reduce at the end.
    sum_p = jnp.zeros((c_out_t, L), jnp.float32)
    ssq_p = jnp.zeros((c_out_t, L), jnp.float32)

    for pi in range(2):
        for pj in range(2):
            ph = 2 * pi + pj
            # Four shifted windows of the padded input = static contiguous lane
            # slices; concatenated along sublanes -> one MXU dot with K = 4*C_in.
            wins = []
            for dh, dw in _TAPS:
                off = (pi + dh) * w_pad + (pj + dw)
                wins.append(x_ref[0, :, off:off + L])
            xcat = jnp.concatenate(wins, axis=0)                   # (4*C_in, L)
            acc = jnp.dot(w_ref[ph], xcat,
                          preferred_element_type=jnp.float32) * mask
            sum_p = sum_p + acc
            ssq_p = ssq_p + acc * acc
            o_ref[0, ph] = acc        # unnormalized; revisited below (VMEM-resident)

    inv_count = 1.0 / (4.0 * h * w_valid)                # valid elems = (2H)*(2W)
    mean = jnp.sum(sum_p, axis=1, keepdims=True) * inv_count        # (C_out_t, 1)
    # Single fused-pass variance in f32.
    # TODO(synk): switch to a shifted / two-pass variance if E[y^2]-mean^2
    # cancellation ever shows up vs the PyTorch reference.
    var = jnp.maximum(jnp.sum(ssq_p, axis=1, keepdims=True) * inv_count
                      - mean * mean, 0.0)
    inv = lax.rsqrt(var + EPS)
    for ph in range(4):
        y = o_ref[0, ph]
        o_ref[0, ph] = jnp.maximum((y - mean) * inv, 0.0)


def _vmem_budget_bytes():
    """Generation-aware VMEM budget (~90 MiB on v5e/v6e, ~45 MiB on v7x)."""
    cap = None
    try:
        cap = getattr(pltpu.get_tpu_info(), "vmem_capacity_bytes", None)
    except Exception:
        cap = None
    if not cap:
        cap = 64 << 20          # conservative default (v7x per-core VMEM)
    return int(cap * 0.7)


def _pick_cout_tile(c_out, c_in, h, w, budget_bytes):
    """Largest C_out block whose estimated per-step footprint fits the budget."""
    w_p = w + 2
    L = h * w_p
    P = (h + 3) * w_p
    fixed = 2 * c_in * P * 2 + (1 << 20)          # double-buffered bf16 input + slack
    cands = [c_out] + [t for t in (256, 128, 64, 32, 16, 8)
                       if t < c_out and c_out % t == 0]
    for t in cands:
        per_step = (2 * 4 * t * L * 4             # double-buffered f32 output block
                    + 2 * 4 * t * 4 * c_in * 2    # double-buffered bf16 weights
                    + 3 * t * L * 4               # f32 temps (sum/ssq partials, acc)
                    + 4 * c_in * L * 2)           # bf16 window-concat temp
        if fixed + int(1.3 * per_step) <= budget_bytes:
            return t
    # TODO(synk): very large H*W*C_out needs a lane-tiled (streaming-stats)
    # variant; fall back to the smallest C_out block.
    return cands[-1]


def unet_up_forward(x, weight_t, cout_tile=None):
    """x: (N, C_in, H, W) f32.  weight_t: (C_in, C_out, 4, 4) ConvTranspose2d
    weight.  Returns (N, C_out, 2H, 2W) f32."""
    N, C_in, H, W = x.shape
    C_out = weight_t.shape[1]
    W_p = W + 2                      # padded row width (lane layout)
    L = H * W_p                      # lanes per output phase
    P = (H + 3) * W_p                # flat padded input; one extra zero row keeps
                                     # every window slice in bounds

    budget = _vmem_budget_bytes()
    if cout_tile is None:
        cout_tile = _pick_cout_tile(C_out, C_in, H, W, budget)
    if C_out % cout_tile != 0 or (cout_tile != C_out and cout_tile % 8 != 0):
        raise ValueError(f"bad cout_tile={cout_tile} for C_out={C_out}")
    n_cb = C_out // cout_tile

    # 1-padded input, shipped once, lane-flattened over the padded spatial grid.
    x_flat = jnp.pad(x, ((0, 0), (0, 0), (1, 2), (1, 1)))
    x_flat = x_flat.reshape(N, C_in, P).astype(jnp.bfloat16)

    # Per-phase weights with the four 2x2 taps concatenated along K:
    # w_phase[2*pi+pj][o, tap*C_in + c] = W_t[c, o, _KMAP[pi][dh], _KMAP[pj][dw]]
    phases = []
    for pi in range(2):
        for pj in range(2):
            taps = [jnp.transpose(weight_t[:, :, _KMAP[pi][dh], _KMAP[pj][dw]])
                    for dh, dw in _TAPS]
            phases.append(jnp.concatenate(taps, axis=1))       # (C_out, 4*C_in)
    w_phase = jnp.stack(phases, axis=0).astype(jnp.bfloat16)   # (4, C_out, 4*C_in)

    kernel = functools.partial(_unet_up_kernel, w_pad=W_p, w_valid=W, h=H)

    out = pl.pallas_call(
        kernel,
        out_shape=jax.ShapeDtypeStruct((N, 4, C_out, L), jnp.float32),
        grid_spec=pltpu.PrefetchScalarGridSpec(
            num_scalar_prefetch=0,
            # C_out block is the fast axis -> the (bigger) input block is only
            # re-fetched when the sample changes.
            grid=(N, n_cb),
            in_specs=[
                pl.BlockSpec((1, C_in, P), lambda n, cb: (n, 0, 0)),
                # TODO(synk): pipeline_mode=pl.Buffered(1) here and on out_specs
                # would trim v7x VMEM further; left at default double-buffering
                # for robustness.
                pl.BlockSpec((4, cout_tile, 4 * C_in), lambda n, cb: (0, cb, 0)),
            ],
            out_specs=pl.BlockSpec((1, 4, cout_tile, L),
                                   lambda n, cb: (n, 0, cb, 0)),
        ),
        compiler_params=pltpu.CompilerParams(
            dimension_semantics=("parallel", "parallel"),
            vmem_limit_bytes=budget),
    )(x_flat, w_phase)

    # Epilogue (one XLA pass): drop the junk columns of the padded row width and
    # interleave the 4 phases into NCHW stride-2 positions.
    # TODO(synk): the fine (column-phase) interleave could be moved in-kernel
    # (XLU interleave / strided lane store) to make this pass fully lane-dense;
    # kept in XLA for robustness.
    out = out.reshape(N, 2, 2, C_out, H, W_p)[..., :W]
    out = out.transpose(0, 3, 4, 1, 5, 2).reshape(N, C_out, 2 * H, 2 * W)
    return out


def _reference(x, weight_t):
    """Pure-JAX reference: ConvTranspose2d(4,2,1,bias=False) -> InstanceNorm2d -> ReLU."""
    w_oihw = jnp.flip(jnp.transpose(weight_t, (1, 0, 2, 3)), axis=(2, 3))
    y = lax.conv_general_dilated(
        x, w_oihw, window_strides=(1, 1),
        padding=((K_SIZE - 1 - PAD,) * 2, (K_SIZE - 1 - PAD,) * 2),
        lhs_dilation=(STRIDE, STRIDE), rhs_dilation=(1, 1),
        dimension_numbers=("NCHW", "OIHW", "NCHW"))
    mean = jnp.mean(y, axis=(2, 3), keepdims=True)
    var = jnp.var(y, axis=(2, 3), keepdims=True)
    return jnp.maximum((y - mean) * lax.rsqrt(var + EPS), 0.0)


if __name__ == "__main__":
    key = jax.random.PRNGKey(0)
    k_x, k_w = jax.random.split(key)

    N, C_in, C_out, H, W = 2, 4, 8, 16, 16
    x = jax.random.normal(k_x, (N, C_in, H, W), dtype=jnp.float32)

    # Deterministic ConvTranspose2d weight (shape (in, out, kH, kW)).
    fan_in = C_in * K_SIZE * K_SIZE
    weight_t = jax.random.normal(
        k_w, (C_in, C_out, K_SIZE, K_SIZE), dtype=jnp.float32) * (1.0 / fan_in) ** 0.5

    y = jax.jit(unet_up_forward)(x, weight_t)
    jax.block_until_ready(y)

    assert y.shape == (N, C_out, 2 * H, 2 * W), y.shape
    assert bool(jnp.all(y >= 0.0)), "ReLU output must be non-negative"

    # bf16 MXU operands (f32 accumulation) => compare at bf16-level tolerance.
    y_ref = _reference(x, weight_t)
    max_err = float(jnp.max(jnp.abs(y - y_ref)))
    assert max_err < 7.5e-2, f"mismatch vs reference: max_err={max_err}"

    print("KERNEL_OK")
</pallas_src>

<mosaic_0001>
module attributes {stable_mosaic.version = 11 : i64} {
  func.func @_unet_up_kernel(%arg0: i32, %arg1: i32, %arg2: memref<1x4x342xbf16, #tpu.memory_space<vmem>>, %arg3: memref<4x8x16xbf16, #tpu.memory_space<vmem>>, %arg4: memref<1x4x8x288xf32, #tpu.memory_space<vmem>>) attributes {dimension_semantics = [#tpu.dimension_semantics<parallel>, #tpu.dimension_semantics<parallel>], iteration_bounds = array<i64: 2, 1>, scalar_prefetch = 0 : i64, scratch_operands = 0 : i64, tpu.core_type = #tpu.core_type<tc>, window_params = [{transform_indices = @transform_0, window_bounds = array<i64: 1, 4, 342>}, {transform_indices = @transform_1, window_bounds = array<i64: 4, 8, 16>}, {transform_indices = @transform_2, window_bounds = array<i64: 1, 4, 8, 288>}]} {
    %0 = tpu.iota {dimensions = array<i32: 1>} : vector<1x288xi32>
    %c18_i32 = arith.constant 18 : i32
    %c0_i32 = arith.constant 0 : i32
    %1 = arith.cmpi eq, %c18_i32, %c0_i32 : i32
    %c1_i32 = arith.constant 1 : i32
    %2 = arith.select %1, %c1_i32, %c18_i32 : i32
    %3 = vector.broadcast %2 : i32 to vector<1x288xi32>
    %4 = arith.remsi %0, %3 : vector<1x288xi32>
    %c0_i32_0 = arith.constant 0 : i32
    %5 = vector.broadcast %c0_i32_0 : i32 to vector<1x288xi32>
    %6 = arith.cmpi ne, %4, %5 : vector<1x288xi32>
    %c0_i32_1 = arith.constant 0 : i32
    %7 = vector.broadcast %c0_i32_1 : i32 to vector<1x288xi32>
    %8 = arith.cmpi slt, %4, %7 : vector<1x288xi32>
    %c0_i32_2 = arith.constant 0 : i32
    %9 = arith.cmpi slt, %2, %c0_i32_2 : i32
    %10 = vector.broadcast %9 : i1 to vector<1x288xi1>
    %11 = vector.broadcast %10 : vector<1x288xi1> to vector<1x288xi1>
    %12 = arith.xori %8, %11 : vector<1x288xi1>
    %13 = arith.andi %12, %6 : vector<1x288xi1>
    %14 = vector.broadcast %2 : i32 to vector<1x288xi32>
    %15 = arith.addi %4, %14 : vector<1x288xi32>
    %16 = arith.select %13, %15, %4 : vector<1x288xi1>, vector<1x288xi32>
    %c16_i32 = arith.constant 16 : i32
    %17 = vector.broadcast %c16_i32 : i32 to vector<1x288xi32>
    %18 = arith.cmpi slt, %16, %17 : vector<1x288xi32>
    %19 = arith.extui %18 : vector<1x288xi1> to vector<1x288xi32>
    %20 = arith.sitofp %19 : vector<1x288xi32> to vector<1x288xf32>
    %cst = arith.constant 0.000000e+00 : f32
    %21 = vector.broadcast %cst : f32 to vector<8x288xf32>
    %cst_3 = arith.constant 0.000000e+00 : f32
    %22 = vector.broadcast %cst_3 : f32 to vector<8x288xf32>
    %c0 = arith.constant 0 : index
    %c0_4 = arith.constant 0 : index
    %c0_5 = arith.constant 0 : index
    %23 = vector.load %arg2[%c0, %c0_4, %c0_5] : memref<1x4x342xbf16, #tpu.memory_space<vmem>>, vector<1x4x288xbf16>
    %24 = vector.shape_cast %23 : vector<1x4x288xbf16> to vector<4x288xbf16>
    %c0_6 = arith.constant 0 : index
    %c0_7 = arith.constant 0 : index
    %c1 = arith.constant 1 : index
    %25 = vector.load %arg2[%c0_6, %c0_7, %c1] : memref<1x4x342xbf16, #tpu.memory_space<vmem>>, vector<1x4x288xbf16>
    %26 = vector.shape_cast %25 : vector<1x4x288xbf16> to vector<4x288xbf16>
    %c0_8 = arith.constant 0 : index
    %c0_9 = arith.constant 0 : index
    %c18 = arith.constant 18 : index
    %27 = vector.load %arg2[%c0_8, %c0_9, %c18] : memref<1x4x342xbf16, #tpu.memory_space<vmem>>, vector<1x4x288xbf16>
    %28 = vector.shape_cast %27 : vector<1x4x288xbf16> to vector<4x288xbf16>
    %c0_10 = arith.constant 0 : index
    %c0_11 = arith.constant 0 : index
    %c19 = arith.constant 19 : index
    %29 = vector.load %arg2[%c0_10, %c0_11, %c19] : memref<1x4x342xbf16, #tpu.memory_space<vmem>>, vector<1x4x288xbf16>
    %30 = vector.shape_cast %29 : vector<1x4x288xbf16> to vector<4x288xbf16>
    %31 = tpu.concatenate %24, %26, %28, %30 in 0 : vector<4x288xbf16>, vector<4x288xbf16>, vector<4x288xbf16>, vector<4x288xbf16> -> vector<16x288xbf16>
    %c0_12 = arith.constant 0 : index
    %c0_13 = arith.constant 0 : index
    %c0_14 = arith.constant 0 : index
    %32 = vector.load %arg3[%c0_12, %c0_13, %c0_14] : memref<4x8x16xbf16, #tpu.memory_space<vmem>>, vector<1x8x16xbf16>
    %33 = vector.shape_cast %32 : vector<1x8x16xbf16> to vector<8x16xbf16>
    %cst_15 = arith.constant dense<0.000000e+00> : vector<8x288xf32>
    %34 = tpu.matmul %33, %31, %cst_15 {dimension_numbers = #tpu.dot_dimension_numbers<[1], [0], [0], [1], [0, 0, 1, 1], [], []>} : vector<8x16xbf16>, vector<16x288xbf16>, vector<8x288xf32> -> vector<8x288xf32>
    %35 = vector.broadcast %20 : vector<1x288xf32> to vector<8x288xf32>
    %36 = arith.mulf %34, %35 : vector<8x288xf32>
    %37 = arith.addf %21, %36 : vector<8x288xf32>
    %38 = arith.mulf %36, %36 : vector<8x288xf32>
    %39 = arith.addf %22, %38 : vector<8x288xf32>
    %c0_16 = arith.constant 0 : index
    %c0_17 = arith.constant 0 : index
    %c0_18 = arith.constant 0 : index
    %c0_19 = arith.constant 0 : index
    %40 = vector.load %arg4[%c0_16, %c0_17, %c0_18, %c0_19] : memref<1x4x8x288xf32, #tpu.memory_space<vmem>>, vector<1x1x8x288xf32>
    %41 = vector.shape_cast %40 : vector<1x1x8x288xf32> to vector<8x288xf32>
    %42 = vector.shape_cast %36 : vector<8x288xf32> to vector<1x1x8x288xf32>
    tpu.vector_store %arg4[%c0_16, %c0_17, %c0_18, %c0_19], %42 {strides = array<i32>} : memref<1x4x8x288xf32, #tpu.memory_space<vmem>>, vector<1x1x8x288xf32>,
    %c0_20 = arith.constant 0 : index
    %c0_21 = arith.constant 0 : index
    %c1_22 = arith.constant 1 : index
    %43 = vector.load %arg2[%c0_20, %c0_21, %c1_22] : memref<1x4x342xbf16, #tpu.memory_space<vmem>>, vector<1x4x288xbf16>
    %44 = vector.shape_cast %43 : vector<1x4x288xbf16> to vector<4x288xbf16>
    %c0_23 = arith.constant 0 : index
    %c0_24 = arith.constant 0 : index
    %c2 = arith.constant 2 : index
    %45 = vector.load %arg2[%c0_23, %c0_24, %c2] : memref<1x4x342xbf16, #tpu.memory_space<vmem>>, vector<1x4x288xbf16>
    %46 = vector.shape_cast %45 : vector<1x4x288xbf16> to vector<4x288xbf16>
    %c0_25 = arith.constant 0 : index
    %c0_26 = arith.constant 0 : index
    %c19_27 = arith.constant 19 : index
    %47 = vector.load %arg2[%c0_25, %c0_26, %c19_27] : memref<1x4x342xbf16, #tpu.memory_space<vmem>>, vector<1x4x288xbf16>
    %48 = vector.shape_cast %47 : vector<1x4x288xbf16> to vector<4x288xbf16>
    %c0_28 = arith.constant 0 : index
    %c0_29 = arith.constant 0 : index
    %c20 = arith.constant 20 : index
    %49 = vector.load %arg2[%c0_28, %c0_29, %c20] : memref<1x4x342xbf16, #tpu.memory_space<vmem>>, vector<1x4x288xbf16>
    %50 = vector.shape_cast %49 : vector<1x4x288xbf16> to vector<4x288xbf16>
    %51 = tpu.concatenate %44, %46, %48, %50 in 0 : vector<4x288xbf16>, vector<4x288xbf16>, vector<4x288xbf16>, vector<4x288xbf16> -> vector<16x288xbf16>
    %c1_30 = arith.constant 1 : index
    %c0_31 = arith.constant 0 : index
    %c0_32 = arith.constant 0 : index
    %52 = vector.load %arg3[%c1_30, %c0_31, %c0_32] : memref<4x8x16xbf16, #tpu.memory_space<vmem>>, vector<1x8x16xbf16>
    %53 = vector.shape_cast %52 : vector<1x8x16xbf16> to vector<8x16xbf16>
    %cst_33 = arith.constant dense<0.000000e+00> : vector<8x288xf32>
    %54 = tpu.matmul %53, %51, %cst_33 {dimension_numbers = #tpu.dot_dimension_numbers<[1], [0], [0], [1], [0, 0, 1, 1], [], []>} : vector<8x16xbf16>, vector<16x288xbf16>, vector<8x288xf32> -> vector<8x288xf32>
    %55 = vector.broadcast %20 : vector<1x288xf32> to vector<8x288xf32>
    %56 = arith.mulf %54, %55 : vector<8x288xf32>
    %57 = arith.addf %37, %56 : vector<8x288xf32>
    %58 = arith.mulf %56, %56 : vector<8x288xf32>
    %59 = arith.addf %39, %58 : vector<8x288xf32>
    %c0_34 = arith.constant 0 : index
    %c1_35 = arith.constant 1 : index
    %c0_36 = arith.constant 0 : index
    %c0_37 = arith.constant 0 : index
    %60 = vector.load %arg4[%c0_34, %c1_35, %c0_36, %c0_37] : memref<1x4x8x288xf32, #tpu.memory_space<vmem>>, vector<1x1x8x288xf32>
    %61 = vector.shape_cast %60 : vector<1x1x8x288xf32> to vector<8x288xf32>
    %62 = vector.shape_cast %56 : vector<8x288xf32> to vector<1x1x8x288xf32>
    tpu.vector_store %arg4[%c0_34, %c1_35, %c0_36, %c0_37], %62 {strides = array<i32>} : memref<1x4x8x288xf32, #tpu.memory_space<vmem>>, vector<1x1x8x288xf32>,
    %c0_38 = arith.constant 0 : index
    %c0_39 = arith.constant 0 : index
    %c18_40 = arith.constant 18 : index
    %63 = vector.load %arg2[%c0_38, %c0_39, %c18_40] : memref<1x4x342xbf16, #tpu.memory_space<vmem>>, vector<1x4x288xbf16>
    %64 = vector.shape_cast %63 : vector<1x4x288xbf16> to vector<4x288xbf16>
    %c0_41 = arith.constant 0 : index
    %c0_42 = arith.constant 0 : index
    %c19_43 = arith.constant 19 : index
    %65 = vector.load %arg2[%c0_41, %c0_42, %c19_43] : memref<1x4x342xbf16, #tpu.memory_space<vmem>>, vector<1x4x288xbf16>
    %66 = vector.shape_cast %65 : vector<1x4x288xbf16> to vector<4x288xbf16>
    %c0_44 = arith.constant 0 : index
    %c0_45 = arith.constant 0 : index
    %c36 = arith.constant 36 : index
    %67 = vector.load %arg2[%c0_44, %c0_45, %c36] : memref<1x4x342xbf16, #tpu.memory_space<vmem>>, vector<1x4x288xbf16>
    %68 = vector.shape_cast %67 : vector<1x4x288xbf16> to vector<4x288xbf16>
    %c0_46 = arith.constant 0 : index
    %c0_47 = arith.constant 0 : index
    %c37 = arith.constant 37 : index
    %69 = vector.load %arg2[%c0_46, %c0_47, %c37] : memref<1x4x342xbf16, #tpu.memory_space<vmem>>, vector<1x4x288xbf16>
    %70 = vector.shape_cast %69 : vector<1x4x288xbf16> to vector<4x288xbf16>
    %71 = tpu.concatenate %64, %66, %68, %70 in 0 : vector<4x288xbf16>, vector<4x288xbf16>, vector<4x288xbf16>, vector<4x288xbf16> -> vector<16x288xbf16>
    %c2_48 = arith.constant 2 : index
    %c0_49 = arith.constant 0 : index
    %c0_50 = arith.constant 0 : index
    %72 = vector.load %arg3[%c2_48, %c0_49, %c0_50] : memref<4x8x16xbf16, #tpu.memory_space<vmem>>, vector<1x8x16xbf16>
    %73 = vector.shape_cast %72 : vector<1x8x16xbf16> to vector<8x16xbf16>
    %cst_51 = arith.constant dense<0.000000e+00> : vector<8x288xf32>
    %74 = tpu.matmul %73, %71, %cst_51 {dimension_numbers = #tpu.dot_dimension_numbers<[1], [0], [0], [1], [0, 0, 1, 1], [], []>} : vector<8x16xbf16>, vector<16x288xbf16>, vector<8x288xf32> -> vector<8x288xf32>
    %75 = vector.broadcast %20 : vector<1x288xf32> to vector<8x288xf32>
    %76 = arith.mulf %74, %75 : vector<8x288xf32>
    %77 = arith.addf %57, %76 : vector<8x288xf32>
    %78 = arith.mulf %76, %76 : vector<8x288xf32>
    %79 = arith.addf %59, %78 : vector<8x288xf32>
    %c0_52 = arith.constant 0 : index
    %c2_53 = arith.constant 2 : index
    %c0_54 = arith.constant 0 : index
    %c0_55 = arith.constant 0 : index
    %80 = vector.load %arg4[%c0_52, %c2_53, %c0_54, %c0_55] : memref<1x4x8x288xf32, #tpu.memory_space<vmem>>, vector<1x1x8x288xf32>
    %81 = vector.shape_cast %80 : vector<1x1x8x288xf32> to vector<8x288xf32>
    %82 = vector.shape_cast %76 : vector<8x288xf32> to vector<1x1x8x288xf32>
    tpu.vector_store %arg4[%c0_52, %c2_53, %c0_54, %c0_55], %82 {strides = array<i32>} : memref<1x4x8x288xf32, #tpu.memory_space<vmem>>, vector<1x1x8x288xf32>,
    %c0_56 = arith.constant 0 : index
    %c0_57 = arith.constant 0 : index
    %c19_58 = arith.constant 19 : index
    %83 = vector.load %arg2[%c0_56, %c0_57, %c19_58] : memref<1x4x342xbf16, #tpu.memory_space<vmem>>, vector<1x4x288xbf16>
    %84 = vector.shape_cast %83 : vector<1x4x288xbf16> to vector<4x288xbf16>
    %c0_59 = arith.constant 0 : index
    %c0_60 = arith.constant 0 : index
    %c20_61 = arith.constant 20 : index
    %85 = vector.load %arg2[%c0_59, %c0_60, %c20_61] : memref<1x4x342xbf16, #tpu.memory_space<vmem>>, vector<1x4x288xbf16>
    %86 = vector.shape_cast %85 : vector<1x4x288xbf16> to vector<4x288xbf16>
    %c0_62 = arith.constant 0 : index
    %c0_63 = arith.constant 0 : index
    %c37_64 = arith.constant 37 : index
    %87 = vector.load %arg2[%c0_62, %c0_63, %c37_64] : memref<1x4x342xbf16, #tpu.memory_space<vmem>>, vector<1x4x288xbf16>
    %88 = vector.shape_cast %87 : vector<1x4x288xbf16> to vector<4x288xbf16>
    %c0_65 = arith.constant 0 : index
    %c0_66 = arith.constant 0 : index
    %c38 = arith.constant 38 : index
    %89 = vector.load %arg2[%c0_65, %c0_66, %c38] : memref<1x4x342xbf16, #tpu.memory_space<vmem>>, vector<1x4x288xbf16>
    %90 = vector.shape_cast %89 : vector<1x4x288xbf16> to vector<4x288xbf16>
    %91 = tpu.concatenate %84, %86, %88, %90 in 0 : vector<4x288xbf16>, vector<4x288xbf16>, vector<4x288xbf16>, vector<4x288xbf16> -> vector<16x288xbf16>
    %c3 = arith.constant 3 : index
    %c0_67 = arith.constant 0 : index
    %c0_68 = arith.constant 0 : index
    %92 = vector.load %arg3[%c3, %c0_67, %c0_68] : memref<4x8x16xbf16, #tpu.memory_space<vmem>>, vector<1x8x16xbf16>
    %93 = vector.shape_cast %92 : vector<1x8x16xbf16> to vector<8x16xbf16>
    %cst_69 = arith.constant dense<0.000000e+00> : vector<8x288xf32>
    %94 = tpu.matmul %93, %91, %cst_69 {dimension_numbers = #tpu.dot_dimension_numbers<[1], [0], [0], [1], [0, 0, 1, 1], [], []>} : vector<8x16xbf16>, vector<16x288xbf16>, vector<8x288xf32> -> vector<8x288xf32>
    %95 = vector.broadcast %20 : vector<1x288xf32> to vector<8x288xf32>
    %96 = arith.mulf %94, %95 : vector<8x288xf32>
    %97 = arith.addf %77, %96 : vector<8x288xf32>
    %98 = arith.mulf %96, %96 : vector<8x288xf32>
    %99 = arith.addf %79, %98 : vector<8x288xf32>
    %c0_70 = arith.constant 0 : index
    %c3_71 = arith.constant 3 : index
    %c0_72 = arith.constant 0 : index
    %c0_73 = arith.constant 0 : index
    %100 = vector.load %arg4[%c0_70, %c3_71, %c0_72, %c0_73] : memref<1x4x8x288xf32, #tpu.memory_space<vmem>>, vector<1x1x8x288xf32>
    %101 = vector.shape_cast %100 : vector<1x1x8x288xf32> to vector<8x288xf32>
    %102 = vector.shape_cast %96 : vector<8x288xf32> to vector<1x1x8x288xf32>
    tpu.vector_store %arg4[%c0_70, %c3_71, %c0_72, %c0_73], %102 {strides = array<i32>} : memref<1x4x8x288xf32, #tpu.memory_space<vmem>>, vector<1x1x8x288xf32>,
    %cst_74 = arith.constant dense<0.000000e+00> : vector<8xf32>
    %103 = vector.multi_reduction <add>, %97, %cst_74 [1] : vector<8x288xf32> to vector<8xf32>
    %104 = vector.shape_cast %103 : vector<8xf32> to vector<8x1xf32>
    %cst_75 = arith.constant 9.765625E-4 : f32
    %105 = vector.broadcast %cst_75 : f32 to vector<8x1xf32>
    %106 = arith.mulf %104, %105 : vector<8x1xf32>
    %cst_76 = arith.constant dense<0.000000e+00> : vector<8xf32>
    %107 = vector.multi_reduction <add>, %99, %cst_76 [1] : vector<8x288xf32> to vector<8xf32>
    %108 = vector.shape_cast %107 : vector<8xf32> to vector<8x1xf32>
    %cst_77 = arith.constant 9.765625E-4 : f32
    %109 = vector.broadcast %cst_77 : f32 to vector<8x1xf32>
    %110 = arith.mulf %108, %109 : vector<8x1xf32>
    %111 = arith.mulf %106, %106 : vector<8x1xf32>
    %112 = arith.subf %110, %111 : vector<8x1xf32>
    %cst_78 = arith.constant 0.000000e+00 : f32
    %113 = vector.broadcast %cst_78 : f32 to vector<8x1xf32>
    %114 = arith.maximumf %112, %113 : vector<8x1xf32>
    %cst_79 = arith.constant 9.99999974E-6 : f32
    %115 = vector.broadcast %cst_79 : f32 to vector<8x1xf32>
    %116 = arith.addf %114, %115 : vector<8x1xf32>
    %117 = math.rsqrt %116 : vector<8x1xf32>
    %c0_80 = arith.constant 0 : index
    %c0_81 = arith.constant 0 : index
    %c0_82 = arith.constant 0 : index
    %c0_83 = arith.constant 0 : index
    %118 = vector.load %arg4[%c0_80, %c0_81, %c0_82, %c0_83] : memref<1x4x8x288xf32, #tpu.memory_space<vmem>>, vector<1x1x8x288xf32>
    %119 = vector.shape_cast %118 : vector<1x1x8x288xf32> to vector<8x288xf32>
    %120 = vector.broadcast %106 : vector<8x1xf32> to vector<8x288xf32>
    %121 = arith.subf %119, %120 : vector<8x288xf32>
    %122 = vector.broadcast %117 : vector<8x1xf32> to vector<8x288xf32>
    %123 = arith.mulf %121, %122 : vector<8x288xf32>
    %cst_84 = arith.constant 0.000000e+00 : f32
    %124 = vector.broadcast %cst_84 : f32 to vector<8x288xf32>
    %125 = arith.maximumf %123, %124 : vector<8x288xf32>
    %c0_85 = arith.constant 0 : index
    %c0_86 = arith.constant 0 : index
    %c0_87 = arith.constant 0 : index
    %c0_88 = arith.constant 0 : index
    %126 = vector.load %arg4[%c0_85, %c0_86, %c0_87, %c0_88] : memref<1x4x8x288xf32, #tpu.memory_space<vmem>>, vector<1x1x8x288xf32>
    %127 = vector.shape_cast %126 : vector<1x1x8x288xf32> to vector<8x288xf32>
    %128 = vector.shape_cast %125 : vector<8x288xf32> to vector<1x1x8x288xf32>
    tpu.vector_store %arg4[%c0_85, %c0_86, %c0_87, %c0_88], %128 {strides = array<i32>} : memref<1x4x8x288xf32, #tpu.memory_space<vmem>>, vector<1x1x8x288xf32>,
    %c0_89 = arith.constant 0 : index
    %c1_90 = arith.constant 1 : index
    %c0_91 = arith.constant 0 : index
    %c0_92 = arith.constant 0 : index
    %129 = vector.load %arg4[%c0_89, %c1_90, %c0_91, %c0_92] : memref<1x4x8x288xf32, #tpu.memory_space<vmem>>, vector<1x1x8x288xf32>
    %130 = vector.shape_cast %129 : vector<1x1x8x288xf32> to vector<8x288xf32>
    %131 = vector.broadcast %106 : vector<8x1xf32> to vector<8x288xf32>
    %132 = arith.subf %130, %131 : vector<8x288xf32>
    %133 = vector.broadcast %117 : vector<8x1xf32> to vector<8x288xf32>
    %134 = arith.mulf %132, %133 : vector<8x288xf32>
    %cst_93 = arith.constant 0.000000e+00 : f32
    %135 = vector.broadcast %cst_93 : f32 to vector<8x288xf32>
    %136 = arith.maximumf %134, %135 : vector<8x288xf32>
    %c0_94 = arith.constant 0 : index
    %c1_95 = arith.constant 1 : index
    %c0_96 = arith.constant 0 : index
    %c0_97 = arith.constant 0 : index
    %137 = vector.load %arg4[%c0_94, %c1_95, %c0_96, %c0_97] : memref<1x4x8x288xf32, #tpu.memory_space<vmem>>, vector<1x1x8x288xf32>
    %138 = vector.shape_cast %137 : vector<1x1x8x288xf32> to vector<8x288xf32>
    %139 = vector.shape_cast %136 : vector<8x288xf32> to vector<1x1x8x288xf32>
    tpu.vector_store %arg4[%c0_94, %c1_95, %c0_96, %c0_97], %139 {strides = array<i32>} : memref<1x4x8x288xf32, #tpu.memory_space<vmem>>, vector<1x1x8x288xf32>,
    %c0_98 = arith.constant 0 : index
    %c2_99 = arith.constant 2 : index
    %c0_100 = arith.constant 0 : index
    %c0_101 = arith.constant 0 : index
    %140 = vector.load %arg4[%c0_98, %c2_99, %c0_100, %c0_101] : memref<1x4x8x288xf32, #tpu.memory_space<vmem>>, vector<1x1x8x288xf32>
    %141 = vector.shape_cast %140 : vector<1x1x8x288xf32> to vector<8x288xf32>
    %142 = vector.broadcast %106 : vector<8x1xf32> to vector<8x288xf32>
    %143 = arith.subf %141, %142 : vector<8x288xf32>
    %144 = vector.broadcast %117 : vector<8x1xf32> to vector<8x288xf32>
    %145 = arith.mulf %143, %144 : vector<8x288xf32>
    %cst_102 = arith.constant 0.000000e+00 : f32
    %146 = vector.broadcast %cst_102 : f32 to vector<8x288xf32>
    %147 = arith.maximumf %145, %146 : vector<8x288xf32>
    %c0_103 = arith.constant 0 : index
    %c2_104 = arith.constant 2 : index
    %c0_105 = arith.constant 0 : index
    %c0_106 = arith.constant 0 : index
    %148 = vector.load %arg4[%c0_103, %c2_104, %c0_105, %c0_106] : memref<1x4x8x288xf32, #tpu.memory_space<vmem>>, vector<1x1x8x288xf32>
    %149 = vector.shape_cast %148 : vector<1x1x8x288xf32> to vector<8x288xf32>
    %150 = vector.shape_cast %147 : vector<8x288xf32> to vector<1x1x8x288xf32>
    tpu.vector_store %arg4[%c0_103, %c2_104, %c0_105, %c0_106], %150 {strides = array<i32>} : memref<1x4x8x288xf32, #tpu.memory_space<vmem>>, vector<1x1x8x288xf32>,
    %c0_107 = arith.constant 0 : index
    %c3_108 = arith.constant 3 : index
    %c0_109 = arith.constant 0 : index
    %c0_110 = arith.constant 0 : index
    %151 = vector.load %arg4[%c0_107, %c3_108, %c0_109, %c0_110] : memref<1x4x8x288xf32, #tpu.memory_space<vmem>>, vector<1x1x8x288xf32>
    %152 = vector.shape_cast %151 : vector<1x1x8x288xf32> to vector<8x288xf32>
    %153 = vector.broadcast %106 : vector<8x1xf32> to vector<8x288xf32>
    %154 = arith.subf %152, %153 : vector<8x288xf32>
    %155 = vector.broadcast %117 : vector<8x1xf32> to vector<8x288xf32>
    %156 = arith.mulf %154, %155 : vector<8x288xf32>
    %cst_111 = arith.constant 0.000000e+00 : f32
    %157 = vector.broadcast %cst_111 : f32 to vector<8x288xf32>
    %158 = arith.maximumf %156, %157 : vector<8x288xf32>
    %c0_112 = arith.constant 0 : index
    %c3_113 = arith.constant 3 : index
    %c0_114 = arith.constant 0 : index
    %c0_115 = arith.constant 0 : index
    %159 = vector.load %arg4[%c0_112, %c3_113, %c0_114, %c0_115] : memref<1x4x8x288xf32, #tpu.memory_space<vmem>>, vector<1x1x8x288xf32>
    %160 = vector.shape_cast %159 : vector<1x1x8x288xf32> to vector<8x288xf32>
    %161 = vector.shape_cast %158 : vector<8x288xf32> to vector<1x1x8x288xf32>
    tpu.vector_store %arg4[%c0_112, %c3_113, %c0_114, %c0_115], %161 {strides = array<i32>} : memref<1x4x8x288xf32, #tpu.memory_space<vmem>>, vector<1x1x8x288xf32>,
    return
  }
  func.func @transform_0(%arg0: i32, %arg1: i32) -> (i32, i32, i32) {
    %c0_i32 = arith.constant 0 : i32
    %c0_i32_0 = arith.constant 0 : i32
    %c0_i32_1 = arith.constant 0 : i32
    return %arg0, %c0_i32, %c0_i32_0 : i32, i32, i32
  }
  func.func @transform_1(%arg0: i32, %arg1: i32) -> (i32, i32, i32) {
    %c0_i32 = arith.constant 0 : i32
    %c0_i32_0 = arith.constant 0 : i32
    %c0_i32_1 = arith.constant 0 : i32
    return %c0_i32, %arg1, %c0_i32_0 : i32, i32, i32
  }
  func.func @transform_2(%arg0: i32, %arg1: i32) -> (i32, i32, i32, i32) {
    %c0_i32 = arith.constant 0 : i32
    %c0_i32_0 = arith.constant 0 : i32
    %c0_i32_1 = arith.constant 0 : i32
    return %arg0, %c0_i32, %arg1, %c0_i32_0 : i32, i32, i32, i32
  }
}

</mosaic_0001>

<llo_original>
// kernel: unet_up_forward.1
$region0: #{unet_up_forward.1}
  #allocation0 [shape = 'u32[]', space=smem, size = 0x4, offset = 0x4, fixed_abs, tag = 'smem constant byte address 0x4 - core index']
  #allocation1 [shape = 'u32[144,128]{1,0:T(1,128)}', space=vmem, size = 0x12000, scoped, tag = 'internal scratch']
  %s0 = inlined_call_operand.vmem [shape: bf16[2,4,342], index: 0, kind: input, shape index: {}]
  %s1 = inlined_call_operand.vmem [shape: bf16[4,8,16], index: 1, kind: input, shape index: {}]
  %s2 = inlined_call_operand.vmem [shape: f32[2,4,8,288], index: 2, kind: output, shape index: {}]
  %s3 = sld [smem:[#allocation0]]
  $region41: #{unet_up_forward.1} parent=0
    _
  %s5 = ssub.s32 1, %s3
  %s6 = scalar_select 0, %s5, %s3
  loop: start=0, step=1, limit=4
  $region2: #{unet_up_forward.1} parent=0 // loop_pre_header
    _
  $region3: #{unet_up_forward.1} parent=0 // loop_header
    %s8 = sphi 0, %s12
    %p9 = scmp.ge.s32.totalorder %s8, 4
    %s15 = sphi 0, %s27
    %s16 = sphi 0, %s23
    %s17 = sphi 0, %s15
    %s18 = sphi 0, %s16
    %s19 = sphi 0, %s17
    %s20 = sphi 0, %s18
    %s30 = sphi 0, %s32
    %s33 = sphi 0, %s30
    %s34 = sphi 0, %s33
    %s50 = sphi 0, %s34
    %s56 = sphi 0, %s58
    %s59 = sphi 0, %s56
    %s60 = sphi 0, %s59
    %s76 = sphi 0, %s60
    %s84 = sphi 0, %s86
    %s87 = sphi 0, %s84
    %s88 = sphi 0, %s87
    %s104 = sphi 0, %s88
  $region4: #{unet_up_forward.1} parent=0 // loop_header_branch
    %11 = sbr.rel (%p9) target = $region8
  $region5: #{unet_up_forward.1} parent=0 // loop_body
    %s13 = ssub.s32 %s8, 1
    %s14 = ssub.s32 %s8, 2
    %s21 = sadd.s32 1, %s16
    %p22 = scmp.ge.s32.totalorder %s21, 1
    %s23 = scalar_select %p22, 0, %s21
    %s24 = sadd.s32 1, %s15
    %s25 = scalar_select %p22, %s24, %s15
    %p26 = scmp.ge.s32.totalorder %s25, 2
    %s27 = scalar_select %p26, 0, %s25
    %s28 = ssub.s32 %s15, %s27
    %p29 = scmp.eq.s32.totalorder %s28, 0
    %s31 = sadd.s32 %s30, 1
    %s32 = scalar_select %p29, %s30, %s31
    %p35 = pneg %p29
    %p36 = scmp.eq.s32.totalorder %s8, 1
    %p37 = por %p35, %p36
    %p38 = scmp.ne.s32.totalorder %s30, %s33
    %p39 = scmp.eq.s32.totalorder %s8, 0
    %p40 = por %p38, %p39
    %p41 = scmp.ne.s32.totalorder %s30, %s33
    %p42 = scmp.eq.s32.totalorder %s13, 1
    %p43 = por %p41, %p42
    %p44 = scmp.ne.s32.totalorder %s33, %s34
    %p45 = scmp.eq.s32.totalorder %s13, 0
    %p46 = por %p44, %p45
    %p47 = scmp.ne.s32.totalorder %s33, %s34
    %p48 = scmp.eq.s32.totalorder %s14, 1
    %p49 = por %p47, %p48
    %p51 = scmp.ne.s32.totalorder %s34, %s50
    %p52 = scmp.eq.s32.totalorder %s14, 0
    %p53 = por %p51, %p52
    %s54 = ssub.s32 %s16, %s23
    %p55 = scmp.eq.s32.totalorder %s54, 0
    %s57 = sadd.s32 %s56, 1
    %s58 = scalar_select %p55, %s56, %s57
    %p61 = pneg %p55
    %p62 = scmp.eq.s32.totalorder %s8, 1
    %p63 = por %p61, %p62
    %p64 = scmp.ne.s32.totalorder %s56, %s59
    %p65 = scmp.eq.s32.totalorder %s8, 0
    %p66 = por %p64, %p65
    %p67 = scmp.ne.s32.totalorder %s56, %s59
    %p68 = scmp.eq.s32.totalorder %s13, 1
    %p69 = por %p67, %p68
    %p70 = scmp.ne.s32.totalorder %s59, %s60
    %p71 = scmp.eq.s32.totalorder %s13, 0
    %p72 = por %p70, %p71
    %p73 = scmp.ne.s32.totalorder %s59, %s60
    %p74 = scmp.eq.s32.totalorder %s14, 1
    %p75 = por %p73, %p74
    %p77 = scmp.ne.s32.totalorder %s60, %s76
    %p78 = scmp.eq.s32.totalorder %s14, 0
    %p79 = por %p77, %p78
    %s80 = ssub.s32 %s15, %s27
    %s81 = ssub.s32 %s16, %s23
    %s82 = sor.u32 %s80, %s81
    %p83 = scmp.eq.s32.totalorder %s82, 0
    %s85 = sadd.s32 %s84, 1
    %s86 = scalar_select %p83, %s84, %s85
    %p89 = pneg %p83
    %p90 = scmp.eq.s32.totalorder %s8, 1
    %p91 = por %p89, %p90
    %p92 = scmp.ne.s32.totalorder %s84, %s87
    %p93 = scmp.eq.s32.totalorder %s8, 0
    %p94 = por %p92, %p93
    %p95 = scmp.ne.s32.totalorder %s84, %s87
    %p96 = scmp.eq.s32.totalorder %s13, 1
    %p97 = por %p95, %p96
    %p98 = scmp.ne.s32.totalorder %s87, %s88
    %p99 = scmp.eq.s32.totalorder %s13, 0
    %p100 = por %p98, %p99
    %p101 = scmp.ne.s32.totalorder %s87, %s88
    %p102 = scmp.eq.s32.totalorder %s14, 1
    %p103 = por %p101, %p102
    %p105 = scmp.ne.s32.totalorder %s88, %s104
    %p106 = scmp.eq.s32.totalorder %s14, 0
    %p107 = por %p105, %p106
    %p108 = scmp.le.s32.totalorder 1, %s8
    %p109 = scmp.lt.s32.totalorder %s8, 3
    %p110 = pnand %p108, %p109
    %p111 = pneg %p110
    // Predicated region
    $region9: #{unet_up_forward.1} parent=5 // pred_check
      _
    $region10: #{unet_up_forward.1} parent=5 // pred_check_branch
      %113 = sbr.rel (%p110) target = $region12
    $region11: #{unet_up_forward.1} parent=5 // pred_region
      %s114 = ssub.s32 %s8, 1
      // Predicated region
      $region13: #{unet_up_forward.1} parent=11 // pred_check
        %p115 = pneg %p72
      $region14: #{unet_up_forward.1} parent=11 // pred_check_branch
        %117 = sbr.rel (%p115) target = $region16
      $region15: #{unet_up_forward.1} parent=11 // pred_region
        %p118 = scmp.lt.s32.totalorder %s18, 0
        %s119 = scalar_select %p118, %s18, 0
        %s120 = smul.addr %s119, 4
        %s121 = scalar_lea.vmem %s1, %s120
      $region16: #{unet_up_forward.1} parent=11 // pred_fallthru
        _
    $region12: #{unet_up_forward.1} parent=5 // pred_fallthru
      _
    %p122 = scmp.lt.s32.totalorder %s8, 2
    // Predicated region
    $region17: #{unet_up_forward.1} parent=5 // pred_check
      %p123 = pneg %p122
    $region18: #{unet_up_forward.1} parent=5 // pred_check_branch
      %125 = sbr.rel (%p123) target = $region20
    $region19: #{unet_up_forward.1} parent=5 // pred_region
      // Predicated region
      $region21: #{unet_up_forward.1} parent=19 // pred_check
        %p126 = pneg %p40
      $region22: #{unet_up_forward.1} parent=19 // pred_check_branch
        %128 = sbr.rel (%p126) target = $region24
      $region23: #{unet_up_forward.1} parent=19 // pred_region
        %p129 = scmp.lt.s32.totalorder %s15, 1
        %s130 = scalar_select %p129, %s15, 1
        %s131 = smul.addr %s130, 3
        %s132 = smul.addr %s131, 2
        %s133 = scalar_lea.vmem %s0, %s132
      $region24: #{unet_up_forward.1} parent=19 // pred_fallthru
        _
    $region20: #{unet_up_forward.1} parent=5 // pred_fallthru
      _
    %p134 = scmp.le.s32.totalorder 1, %s8
    %p135 = scmp.lt.s32.totalorder %s8, 3
    %p136 = pnand %p134, %p135
    %p137 = pneg %p136
    // Predicated region
    $region25: #{unet_up_forward.1} parent=5 // pred_check
      _
    $region26: #{unet_up_forward.1} parent=5 // pred_check_branch
      %139 = sbr.rel (%p136) target = $region28
    $region27: #{unet_up_forward.1} parent=5 // pred_region
      %s140 = ssub.s32 %s8, 1
      %p141 = scmp.lt.s32.totalorder %s17, 1
      %s142 = scalar_select %p141, %s17, 1
      %s143 = smul.addr %s142, 3
      %s144 = smul.addr %s143, 2
      %s145 = scalar_lea.vmem %s0, %s144
      %p146 = pneg %p46
      %p147 = pneg %p43
      %p148 = scmp.lt.s32.totalorder %s18, 0
      %s149 = scalar_select %p148, %s18, 0
      %s150 = smul.addr %s149, 4
      %s151 = scalar_lea.vmem %s1, %s150
      %p152 = pneg %p72
      %p153 = pneg %p69
      %p154 = pneg %p100
      %p155 = pneg %p97
      %p156 = scmp.lt.s32.totalorder %s17, 1
      %s157 = scalar_select %p156, %s17, 1
      %p158 = scmp.lt.s32.totalorder %s18, 0
      %s159 = scalar_select %p158, %s18, 0
      %s160 = smul.addr %s159, 3
      %s161 = smul.addr %s157, 12
      %s162 = sadd.s32 %s160, %s161
      %s163 = smul.addr %s162, 8
      %s164 = scalar_lea.vmem %s2, %s163
      %p165 = scmp.lt.s32.totalorder %s17, 1
      %s166 = scalar_select %p165, %s17, 1
      %s167 = smul.addr %s166, 3
      %s168 = smul.addr %s167, 2
      %s169 = scalar_lea.vmem %s0, %s168
      %p170 = scmp.lt.s32.totalorder %s18, 0
      %s171 = scalar_select %p170, %s18, 0
      %s172 = smul.addr %s171, 4
      %s173 = scalar_lea.vmem %s1, %s172
      %p174 = scmp.lt.s32.totalorder %s17, 1
      %s175 = scalar_select %p174, %s17, 1
      %p176 = scmp.lt.s32.totalorder %s18, 0
      %s177 = scalar_select %p176, %s18, 0
      %s178 = smul.addr %s177, 3
      %s179 = smul.addr %s175, 12
      %s180 = sadd.s32 %s178, %s179
      %s181 = smul.addr %s180, 8
      %s182 = scalar_lea.vmem %s2, %s181
      %v184 = vlaneseq
      %v185 = vand.u32 %v184, 127
      %v186 = vadd.s32 %v185, 128
      %v187 = vadd.s32 %v185, 256
      %vm188 = vcmp.lt.s32.totalorder %v185, 0
      %v189 = vsub.s32 0, %v185
      %v190 = vsel %vm188, %v189, %v185
      %v191 = vmul.u32.u64.compose %v190, 3817748708
      %v192 = vextract.low.u32 %v191
      %v193 = vextract.high.u32 %v191
      %v194 = vshrl.u32 %v193, 4
      %v195 = vmul.u32 %v194, 18
      %v196 = vsub.s32 %v190, %v195
      %v197 = vsub.s32 0, %v196
      %v198 = vsel %vm188, %v197, %v196
      %vm199 = vcmp.lt.s32.totalorder %v186, 0
      %v200 = vsub.s32 0, %v186
      %v201 = vsel %vm199, %v200, %v186
      %v202 = vmul.u32.u64.compose %v201, 3817748708
      %v203 = vextract.low.u32 %v202
      %v204 = vextract.high.u32 %v202
      %v205 = vshrl.u32 %v204, 4
      %v206 = vmul.u32 %v205, 18
      %v207 = vsub.s32 %v201, %v206
      %v208 = vsub.s32 0, %v207
      %v209 = vsel %vm199, %v208, %v207
      %vm210 = vcmp.lt.s32.totalorder %v187, 0
      %v211 = vsub.s32 0, %v187
      %v212 = vsel %vm210, %v211, %v187
      %v213 = vmul.u32.u64.compose %v212, 3817748708
      %v214 = vextract.low.u32 %v213
      %v215 = vextract.high.u32 %v213
      %v216 = vshrl.u32 %v215, 4
      %v217 = vmul.u32 %v216, 18
      %v218 = vsub.s32 %v212, %v217
      %v219 = vsub.s32 0, %v218
      %v220 = vsel %vm210, %v219, %v218
      %vm221 = vcmp.ne.s32.totalorder %v198, 0
      %vm222 = vcmp.ne.s32.totalorder %v209, 0
      %vm223 = vcmp.ne.s32.totalorder %v220, 0
      %vm224 = vcmp.lt.s32.totalorder %v198, 0
      %vm225 = vcmp.lt.s32.totalorder %v209, 0
      %vm226 = vcmp.lt.s32.totalorder %v220, 0
      %vm227 = vmand %vm224, %vm221
      %vm228 = vmand %vm225, %vm222
      %vm229 = vmand %vm226, %vm223
      %v230 = vadd.s32 %v198, 18
      %v231 = vadd.s32 %v209, 18
      %v232 = vadd.s32 %v220, 18
      %v233 = vsel %vm227, %v230, %v198
      %v234 = vsel %vm228, %v231, %v209
      %v235 = vsel %vm229, %v232, %v220
      %vm236 = vcmp.lt.s32.totalorder %v233, 16
      %vm237 = vcmp.lt.s32.totalorder %v234, 16
      %vm238 = vcmp.lt.s32.totalorder %v235, 16
      %v239 = vsel %vm236, 1, 0
      %v240 = vsel %vm237, 1, 0
      %v241 = vsel %vm238, 1, 0
      %v242 = vcvt.s32.f32 %v239
      %v243 = vcvt.s32.f32 %v240
      %v244 = vcvt.s32.f32 %v241
      %v245 = vld [vmem:[%s169] sm:$0x3f]
      %v247 = vcombine.high %v245, %v245
      %v249 = vunpack.c.l.s4 1983009808
      %v250 = vunpack.c.0.s8 %v249
      %v251 = vlaneseq
      %v252 = vshrl.u32 %v251, 7
      %v253 = vsub.s32 %v250, %v252
      %v254 = vrot.slane %v245, %v253
      %v256 = vunpack.c.l.s4 1983009808
      %v257 = vunpack.c.0.s8 %v256
      %v258 = vlaneseq
      %v259 = vshrl.u32 %v258, 7
      %v260 = vsub.s32 %v257, %v259
      %v261 = vrot.slane %v247, %v260
      %v262 = vcombine.high %v254, %v254
      %v263 = vcombine.low %v245, %v245
      %v265 = vunpack.c.l.s4 1983009808
      %v266 = vunpack.c.0.s8 %v265
      %v267 = vlaneseq
      %v268 = vshrl.u32 %v267, 7
      %v269 = vsub.s32 %v266, %v268
      %v270 = vrot.slane %v263, %v269
      %v271 = vcombine.high %v270, %v270
      %272 = vrot.lane.b32.xlu0 %v270, 127
      %v273 = vpop.permute.xlu0 %272
      %274 = vrot.lane.b32.xlu0 %v271, 127
      %v275 = vpop.permute.xlu0 %274
      %276 = vrot.lane.b32.xlu0 %v254, 127
      %v277 = vpop.permute.xlu0 %276
      %vm278 = vcmask 1039360
      %v279 = vsel %vm278, %v273, %v275
      %v280 = vsel %vm278, %v275, %v277
      %v281 = vcombine.low %v254, %v254
      %v282 = vcombine.low %v261, %v261
      %283 = vrot.lane.b32.xlu0 %v281, 110
      %v284 = vpop.permute.xlu0 %283
      %285 = vrot.lane.b32.xlu0 %v254, 110
      %v286 = vpop.permute.xlu0 %285
      %287 = vrot.lane.b32.xlu0 %v282, 110
      %v288 = vpop.permute.xlu0 %287
      %vm289 = vcmask 900096
      %v290 = vsel %vm289, %v284, %v286
      %v291 = vsel %vm289, %v286, %v288
      %v292 = vcombine.low %v270, %v270
      %293 = vrot.lane.b32.xlu0 %v292, 109
      %v294 = vpop.permute.xlu0 %293
      %295 = vrot.lane.b32.xlu0 %v270, 109
      %v296 = vpop.permute.xlu0 %295
      %297 = vrot.lane.b32.xlu0 %v281, 109
      %v298 = vpop.permute.xlu0 %297
      %vm299 = vcmask 891904
      %v300 = vsel %vm299, %v294, %v296
      %v301 = vsel %vm299, %v296, %v298
      %vm302 = vcmask 1041408
      %v305 = vsel %vm302, %v254, %v279
      %v308 = vsel %vm302, %v262, %v280
      %v311 = vsel %vm302, %v261, %v277
      %vm312 = vcmask 1043456
      %v314 = vsel %vm312, %v305, %v290
      %v316 = vsel %vm312, %v308, %v291
      %v318 = vsel %vm312, %v311, %v288
      %vm319 = vcmask 1045504
      %v321 = vsel %vm319, %v314, %v300
      %v324 = vsel %vm319, %v316, %v301
      %v327 = vsel %vm319, %v318, %v298
      %v329 = vld [vmem:[%s173] sm:$0xf]
      %vm330 = vcmask 130048
      %v332 = vsel %vm330, %v329, 0
      %334 = vmatprep.subr.bf16.mxu0 %v324
      %335 = vmatpush1.bf16.msra.mxu0 %v321
      %336 = vmatprep.subr.bf16.mxu0 0
      %337 = vmatpush1.bf16.msra.mxu0 0
      %338 = vmatprep.subr.bf16.mxu0 0
      %339 = vmatpush1.bf16.msra.mxu0 0
      %340 = vmatprep.subr.bf16.mxu0 0
      %341 = vmatpush1.bf16.msra.mxu0 0
      %342 = vmatprep.subr.bf16.mxu0 0
      %343 = vmatpush1.bf16.msra.mxu0 0
      %344 = vmatprep.subr.bf16.mxu0 0
      %345 = vmatpush1.bf16.msra.mxu0 0
      %346 = vmatprep.subr.bf16.mxu0 0
      %347 = vmatpush1.bf16.msra.mxu0 0
      %348 = vmatprep.subr.bf16.mxu0 0
      %349 = vmatpush1.bf16.msra.mxu0 0
      %350 = vmatprep.subr.bf16.mxu0 0
      %351 = vmatpush1.bf16.msra.mxu0 0
      %352 = vmatprep.subr.bf16.mxu0 0
      %353 = vmatpush1.bf16.msra.mxu0 0
      %354 = vmatprep.subr.bf16.mxu0 0
      %355 = vmatpush1.bf16.msra.mxu0 0
      %356 = vmatprep.subr.bf16.mxu0 0
      %357 = vmatpush1.bf16.msra.mxu0 0
      %358 = vmatprep.subr.bf16.mxu0 0
      %359 = vmatpush1.bf16.msra.mxu0 0
      %360 = vmatprep.subr.bf16.mxu0 0
      %361 = vmatpush1.bf16.msra.mxu0 0
      %362 = vmatprep.subr.bf16.mxu0 0
      %363 = vmatpush1.bf16.msra.mxu0 0
      %364 = vmatprep.subr.bf16.mxu0 0
      %365 = vmatpush1.bf16.msra.mxu0 0
      %366 = vmatprep.mubr.bf16.mxu0 0
      %367 = vmatmul.mubr.bf16.gmra.mrb[0].mxu0 %v332
      %v368 = vpop.f32.mrb[0].mxu0
      %v369 = vadd.f32 0.0, %v368
      %v370 = vpop.f32.mrb[0].mxu0
      %v371 = vadd.f32 0.0, %v370
      %v372 = vpop.f32.mrb[0].mxu0
      %v373 = vpop.f32.mrb[0].mxu0
      %374 = vdwg.mxu0
      %375 = vmatprep.subr.bf16.mxu0 0
      %376 = vmatpush1.bf16.msra.mxu0 %v327
      %377 = vmatprep.subr.bf16.mxu0 0
      %378 = vmatpush1.bf16.msra.mxu0 0
      %379 = vmatprep.subr.bf16.mxu0 0
      %380 = vmatpush1.bf16.msra.mxu0 0
      %381 = vmatprep.subr.bf16.mxu0 0
      %382 = vmatpush1.bf16.msra.mxu0 0
      %383 = vmatprep.subr.bf16.mxu0 0
      %384 = vmatpush1.bf16.msra.mxu0 0
      %385 = vmatprep.subr.bf16.mxu0 0
      %386 = vmatpush1.bf16.msra.mxu0 0
      %387 = vmatprep.subr.bf16.mxu0 0
      %388 = vmatpush1.bf16.msra.mxu0 0
      %389 = vmatprep.subr.bf16.mxu0 0
      %390 = vmatpush1.bf16.msra.mxu0 0
      %391 = vmatprep.subr.bf16.mxu0 0
      %392 = vmatpush1.bf16.msra.mxu0 0
      %393 = vmatprep.subr.bf16.mxu0 0
      %394 = vmatpush1.bf16.msra.mxu0 0
      %395 = vmatprep.subr.bf16.mxu0 0
      %396 = vmatpush1.bf16.msra.mxu0 0
      %397 = vmatprep.subr.bf16.mxu0 0
      %398 = vmatpush1.bf16.msra.mxu0 0
      %399 = vmatprep.subr.bf16.mxu0 0
      %400 = vmatpush1.bf16.msra.mxu0 0
      %401 = vmatprep.subr.bf16.mxu0 0
      %402 = vmatpush1.bf16.msra.mxu0 0
      %403 = vmatprep.subr.bf16.mxu0 0
      %404 = vmatpush1.bf16.msra.mxu0 0
      %405 = vmatprep.subr.bf16.mxu0 0
      %406 = vmatpush1.bf16.msra.mxu0 0
      %407 = vmatprep.mubr.bf16.mxu0 0
      %408 = vmatmul.mubr.bf16.gmra.mrb[0].mxu0 %v332
      %v409 = vpop.f32.mrb[0].mxu0
      %v410 = vadd.f32 0.0, %v409
      %v411 = vpop.f32.mrb[0].mxu0
      %v412 = vpop.f32.mrb[0].mxu0
      %v413 = vpop.f32.mrb[0].mxu0
      %414 = vdwg.mxu0
      %v415 = vmul.f32 %v369, %v242
      %v416 = vmul.f32 %v371, %v243
      %v417 = vmul.f32 %v410, %v244
      %v418 = vadd.f32 %v415, 0.0
      %v419 = vadd.f32 %v416, 0.0
      %v420 = vadd.f32 %v417, 0.0
      %v421 = vmul.f32 %v415, %v415
      %v422 = vmul.f32 %v416, %v416
      %v423 = vmul.f32 %v417, %v417
      %v424 = vadd.f32 %v421, 0.0
      %v425 = vadd.f32 %v422, 0.0
      %v426 = vadd.f32 %v423, 0.0
      %427 = vst [vmem:[%s182] sm:$0xff] %v415
      %428 = vst [vmem:[%s182 + $0x8] sm:$0xff] %v416
      %vm429 = vcmask 261120
      %430 = vst.msk [vmem:[%s182 + $0x10] sm:$0xff] %vm429, %v417
      %v431 = vld [vmem:[%s169] sm:$0x3f]
      %v433 = vcombine.high %v431, %v431
      %v435 = vunpack.c.l.s4 1983009808
      %v436 = vunpack.c.0.s8 %v435
      %v437 = vlaneseq
      %v438 = vshrl.u32 %v437, 7
      %v439 = vsub.s32 %v436, %v438
      %v440 = vrot.slane %v431, %v439
      %v442 = vunpack.c.l.s4 1983009808
      %v443 = vunpack.c.0.s8 %v442
      %v444 = vlaneseq
      %v445 = vshrl.u32 %v444, 7
      %v446 = vsub.s32 %v443, %v445
      %v447 = vrot.slane %v433, %v446
      %v448 = vcombine.high %v440, %v440
      %v449 = vcombine.low %v431, %v431
      %v451 = vunpack.c.l.s4 1983009808
      %v452 = vunpack.c.0.s8 %v451
      %v453 = vlaneseq
      %v454 = vshrl.u32 %v453, 7
      %v455 = vsub.s32 %v452, %v454
      %v456 = vrot.slane %v449, %v455
      %v457 = vcombine.high %v456, %v456
      %458 = vrot.lane.b32.xlu0 %v456, 127
      %v459 = vpop.permute.xlu0 %458
      %460 = vrot.lane.b32.xlu0 %v457, 127
      %v461 = vpop.permute.xlu0 %460
      %462 = vrot.lane.b32.xlu0 %v440, 127
      %v463 = vpop.permute.xlu0 %462
      %v464 = vsel %vm278, %v459, %v461
      %v465 = vsel %vm278, %v461, %v463
      %v466 = vcombine.low %v440, %v440
      %v467 = vcombine.low %v447, %v447
      %468 = vrot.lane.b32.xlu0 %v466, 110
      %v469 = vpop.permute.xlu0 %468
      %470 = vrot.lane.b32.xlu0 %v440, 110
      %v471 = vpop.permute.xlu0 %470
      %472 = vrot.lane.b32.xlu0 %v467, 110
      %v473 = vpop.permute.xlu0 %472
      %v474 = vsel %vm289, %v469, %v471
      %v475 = vsel %vm289, %v471, %v473
      %v476 = vcombine.low %v456, %v456
      %477 = vrot.lane.b32.xlu0 %v476, 109
      %v478 = vpop.permute.xlu0 %477
      %479 = vrot.lane.b32.xlu0 %v456, 109
      %v480 = vpop.permute.xlu0 %479
      %481 = vrot.lane.b32.xlu0 %v466, 109
      %v482 = vpop.permute.xlu0 %481
      %v483 = vsel %vm299, %v478, %v480
      %v484 = vsel %vm299, %v480, %v482
      %v487 = vsel %vm302, %v440, %v464
      %v490 = vsel %vm302, %v448, %v465
      %v493 = vsel %vm302, %v447, %v463
      %v495 = vsel %vm312, %v487, %v474
      %v497 = vsel %vm312, %v490, %v475
      %v499 = vsel %vm312, %v493, %v473
      %v501 = vsel %vm319, %v495, %v483
      %v503 = vsel %vm319, %v497, %v484
      %v505 = vsel %vm319, %v499, %v482
      %s506 = scalar_lea.vmem %s173, 4
      %v507 = vld [vmem:[%s506] sm:$0xf]
      %511 = vrot.lane.b32.xlu0 %v501, 127
      %v512 = vpop.permute.xlu0 %511
      %513 = vrot.lane.b32.xlu0 %v503, 127
      %v514 = vpop.permute.xlu0 %513
      %515 = vrot.lane.b32.xlu0 %v505, 127
      %v516 = vpop.permute.xlu0 %515
      %v517 = vsel %vm278, %v512, %v514
      %v518 = vsel %vm278, %v514, %v516
      %v523 = vsel %vm330, %v507, 0
      %525 = vmatprep.subr.bf16.mxu0 %v518
      %526 = vmatpush1.bf16.msra.mxu0 %v517
      %527 = vmatprep.subr.bf16.mxu0 0
      %528 = vmatpush1.bf16.msra.mxu0 0
      %529 = vmatprep.subr.bf16.mxu0 0
      %530 = vmatpush1.bf16.msra.mxu0 0
      %531 = vmatprep.subr.bf16.mxu0 0
      %532 = vmatpush1.bf16.msra.mxu0 0
      %533 = vmatprep.subr.bf16.mxu0 0
      %534 = vmatpush1.bf16.msra.mxu0 0
      %535 = vmatprep.subr.bf16.mxu0 0
      %536 = vmatpush1.bf16.msra.mxu0 0
      %537 = vmatprep.subr.bf16.mxu0 0
      %538 = vmatpush1.bf16.msra.mxu0 0
      %539 = vmatprep.subr.bf16.mxu0 0
      %540 = vmatpush1.bf16.msra.mxu0 0
      %541 = vmatprep.subr.bf16.mxu0 0
      %542 = vmatpush1.bf16.msra.mxu0 0
      %543 = vmatprep.subr.bf16.mxu0 0
      %544 = vmatpush1.bf16.msra.mxu0 0
      %545 = vmatprep.subr.bf16.mxu0 0
      %546 = vmatpush1.bf16.msra.mxu0 0
      %547 = vmatprep.subr.bf16.mxu0 0
      %548 = vmatpush1.bf16.msra.mxu0 0
      %549 = vmatprep.subr.bf16.mxu0 0
      %550 = vmatpush1.bf16.msra.mxu0 0
      %551 = vmatprep.subr.bf16.mxu0 0
      %552 = vmatpush1.bf16.msra.mxu0 0
      %553 = vmatprep.subr.bf16.mxu0 0
      %554 = vmatpush1.bf16.msra.mxu0 0
      %555 = vmatprep.subr.bf16.mxu0 0
      %556 = vmatpush1.bf16.msra.mxu0 0
      %557 = vmatprep.mubr.bf16.mxu0 0
      %558 = vmatmul.mubr.bf16.gmra.mrb[0].mxu0 %v523
      %v559 = vpop.f32.mrb[0].mxu0
      %v560 = vadd.f32 0.0, %v559
      %v561 = vpop.f32.mrb[0].mxu0
      %v562 = vadd.f32 0.0, %v561
      %v563 = vpop.f32.mrb[0].mxu0
      %v564 = vpop.f32.mrb[0].mxu0
      %565 = vdwg.mxu0
      %566 = vmatprep.subr.bf16.mxu0 0
      %567 = vmatpush1.bf16.msra.mxu0 %v516
      %568 = vmatprep.subr.bf16.mxu0 0
      %569 = vmatpush1.bf16.msra.mxu0 0
      %570 = vmatprep.subr.bf16.mxu0 0
      %571 = vmatpush1.bf16.msra.mxu0 0
      %572 = vmatprep.subr.bf16.mxu0 0
      %573 = vmatpush1.bf16.msra.mxu0 0
      %574 = vmatprep.subr.bf16.mxu0 0
      %575 = vmatpush1.bf16.msra.mxu0 0
      %576 = vmatprep.subr.bf16.mxu0 0
      %577 = vmatpush1.bf16.msra.mxu0 0
      %578 = vmatprep.subr.bf16.mxu0 0
      %579 = vmatpush1.bf16.msra.mxu0 0
      %580 = vmatprep.subr.bf16.mxu0 0
      %581 = vmatpush1.bf16.msra.mxu0 0
      %582 = vmatprep.subr.bf16.mxu0 0
      %583 = vmatpush1.bf16.msra.mxu0 0
      %584 = vmatprep.subr.bf16.mxu0 0
      %585 = vmatpush1.bf16.msra.mxu0 0
      %586 = vmatprep.subr.bf16.mxu0 0
      %587 = vmatpush1.bf16.msra.mxu0 0
      %588 = vmatprep.subr.bf16.mxu0 0
      %589 = vmatpush1.bf16.msra.mxu0 0
      %590 = vmatprep.subr.bf16.mxu0 0
      %591 = vmatpush1.bf16.msra.mxu0 0
      %592 = vmatprep.subr.bf16.mxu0 0
      %593 = vmatpush1.bf16.msra.mxu0 0
      %594 = vmatprep.subr.bf16.mxu0 0
      %595 = vmatpush1.bf16.msra.mxu0 0
      %596 = vmatprep.subr.bf16.mxu0 0
      %597 = vmatpush1.bf16.msra.mxu0 0
      %598 = vmatprep.mubr.bf16.mxu0 0
      %599 = vmatmul.mubr.bf16.gmra.mrb[0].mxu0 %v523
      %v600 = vpop.f32.mrb[0].mxu0
      %v601 = vadd.f32 0.0, %v600
      %v602 = vpop.f32.mrb[0].mxu0
      %v603 = vpop.f32.mrb[0].mxu0
      %v604 = vpop.f32.mrb[0].mxu0
      %605 = vdwg.mxu0
      %v606 = vmul.f32 %v560, %v242
      %v607 = vmul.f32 %v562, %v243
      %v608 = vmul.f32 %v601, %v244
      %v609 = vadd.f32 %v418, %v606
      %v610 = vadd.f32 %v419, %v607
      %v611 = vadd.f32 %v420, %v608
      %v612 = vmul.f32 %v606, %v606
      %v613 = vmul.f32 %v607, %v607
      %v614 = vmul.f32 %v608, %v608
      %v615 = vadd.f32 %v424, %v612
      %v616 = vadd.f32 %v425, %v613
      %v617 = vadd.f32 %v426, %v614
      %s618 = scalar_lea.vmem %s182, 24
      %619 = vst [vmem:[%s618] sm:$0xff] %v606
      %620 = vst [vmem:[%s618 + $0x8] sm:$0xff] %v607
      %621 = vst.msk [vmem:[%s618 + $0x10] sm:$0xff] %vm429, %v608
      %v622 = vld [vmem:[%s169] sm:$0x3f]
      %v624 = vcombine.high %v622, %v622
      %v626 = vunpack.c.l.s4 1983009808
      %v627 = vunpack.c.0.s8 %v626
      %v628 = vlaneseq
      %v629 = vshrl.u32 %v628, 7
      %v630 = vsub.s32 %v627, %v629
      %v631 = vrot.slane %v622, %v630
      %v633 = vunpack.c.l.s4 1983009808
      %v634 = vunpack.c.0.s8 %v633
      %v635 = vlaneseq
      %v636 = vshrl.u32 %v635, 7
      %v637 = vsub.s32 %v634, %v636
      %v638 = vrot.slane %v624, %v637
      %v639 = vcombine.high %v631, %v631
      %v640 = vcombine.low %v622, %v622
      %v642 = vunpack.c.l.s4 1983009808
      %v643 = vunpack.c.0.s8 %v642
      %v644 = vlaneseq
      %v645 = vshrl.u32 %v644, 7
      %v646 = vsub.s32 %v643, %v645
      %v647 = vrot.slane %v640, %v646
      %v648 = vcombine.high %v647, %v647
      %649 = vrot.lane.b32.xlu0 %v647, 127
      %v650 = vpop.permute.xlu0 %649
      %651 = vrot.lane.b32.xlu0 %v648, 127
      %v652 = vpop.permute.xlu0 %651
      %653 = vrot.lane.b32.xlu0 %v631, 127
      %v654 = vpop.permute.xlu0 %653
      %v655 = vsel %vm278, %v650, %v652
      %v656 = vsel %vm278, %v652, %v654
      %v657 = vcombine.low %v631, %v631
      %v658 = vcombine.low %v638, %v638
      %659 = vrot.lane.b32.xlu0 %v657, 110
      %v660 = vpop.permute.xlu0 %659
      %661 = vrot.lane.b32.xlu0 %v631, 110
      %v662 = vpop.permute.xlu0 %661
      %663 = vrot.lane.b32.xlu0 %v658, 110
      %v664 = vpop.permute.xlu0 %663
      %v665 = vsel %vm289, %v660, %v662
      %v666 = vsel %vm289, %v662, %v664
      %v667 = vcombine.low %v647, %v647
      %668 = vrot.lane.b32.xlu0 %v667, 109
      %v669 = vpop.permute.xlu0 %668
      %670 = vrot.lane.b32.xlu0 %v647, 109
      %v671 = vpop.permute.xlu0 %670
      %672 = vrot.lane.b32.xlu0 %v657, 109
      %v673 = vpop.permute.xlu0 %672
      %v674 = vsel %vm299, %v669, %v671
      %v675 = vsel %vm299, %v671, %v673
      %v678 = vsel %vm302, %v631, %v655
      %v681 = vsel %vm302, %v639, %v656
      %v684 = vsel %vm302, %v638, %v654
      %v686 = vsel %vm312, %v678, %v665
      %v688 = vsel %vm312, %v681, %v666
      %v690 = vsel %vm312, %v684, %v664
      %v692 = vsel %vm319, %v686, %v674
      %v694 = vsel %vm319, %v688, %v675
      %v696 = vsel %vm319, %v690, %v673
      %s697 = scalar_lea.vmem %s173, 8
      %v698 = vld [vmem:[%s697] sm:$0xf]
      %702 = vrot.lane.b32.xlu0 %v692, 110
      %v703 = vpop.permute.xlu0 %702
      %704 = vrot.lane.b32.xlu0 %v694, 110
      %v705 = vpop.permute.xlu0 %704
      %706 = vrot.lane.b32.xlu0 %v696, 110
      %v707 = vpop.permute.xlu0 %706
      %v708 = vsel %vm289, %v703, %v705
      %v709 = vsel %vm289, %v705, %v707
      %v714 = vsel %vm330, %v698, 0
      %716 = vmatprep.subr.bf16.mxu0 %v709
      %717 = vmatpush1.bf16.msra.mxu0 %v708
      %718 = vmatprep.subr.bf16.mxu0 0
      %719 = vmatpush1.bf16.msra.mxu0 0
      %720 = vmatprep.subr.bf16.mxu0 0
      %721 = vmatpush1.bf16.msra.mxu0 0
      %722 = vmatprep.subr.bf16.mxu0 0
      %723 = vmatpush1.bf16.msra.mxu0 0
      %724 = vmatprep.subr.bf16.mxu0 0
      %725 = vmatpush1.bf16.msra.mxu0 0
      %726 = vmatprep.subr.bf16.mxu0 0
      %727 = vmatpush1.bf16.msra.mxu0 0
      %728 = vmatprep.subr.bf16.mxu0 0
      %729 = vmatpush1.bf16.msra.mxu0 0
      %730 = vmatprep.subr.bf16.mxu0 0
      %731 = vmatpush1.bf16.msra.mxu0 0
      %732 = vmatprep.subr.bf16.mxu0 0
      %733 = vmatpush1.bf16.msra.mxu0 0
      %734 = vmatprep.subr.bf16.mxu0 0
      %735 = vmatpush1.bf16.msra.mxu0 0
      %736 = vmatprep.subr.bf16.mxu0 0
      %737 = vmatpush1.bf16.msra.mxu0 0
      %738 = vmatprep.subr.bf16.mxu0 0
      %739 = vmatpush1.bf16.msra.mxu0 0
      %740 = vmatprep.subr.bf16.mxu0 0
      %741 = vmatpush1.bf16.msra.mxu0 0
      %742 = vmatprep.subr.bf16.mxu0 0
      %743 = vmatpush1.bf16.msra.mxu0 0
      %744 = vmatprep.subr.bf16.mxu0 0
      %745 = vmatpush1.bf16.msra.mxu0 0
      %746 = vmatprep.subr.bf16.mxu0 0
      %747 = vmatpush1.bf16.msra.mxu0 0
      %748 = vmatprep.mubr.bf16.mxu0 0
      %749 = vmatmul.mubr.bf16.gmra.mrb[0].mxu0 %v714
      %v750 = vpop.f32.mrb[0].mxu0
      %v751 = vadd.f32 0.0, %v750
      %v752 = vpop.f32.mrb[0].mxu0
      %v753 = vadd.f32 0.0, %v752
      %v754 = vpop.f32.mrb[0].mxu0
      %v755 = vpop.f32.mrb[0].mxu0
      %756 = vdwg.mxu0
      %757 = vmatprep.subr.bf16.mxu0 0
      %758 = vmatpush1.bf16.msra.mxu0 %v707
      %759 = vmatprep.subr.bf16.mxu0 0
      %760 = vmatpush1.bf16.msra.mxu0 0
      %761 = vmatprep.subr.bf16.mxu0 0
      %762 = vmatpush1.bf16.msra.mxu0 0
      %763 = vmatprep.subr.bf16.mxu0 0
      %764 = vmatpush1.bf16.msra.mxu0 0
      %765 = vmatprep.subr.bf16.mxu0 0
      %766 = vmatpush1.bf16.msra.mxu0 0
      %767 = vmatprep.subr.bf16.mxu0 0
      %768 = vmatpush1.bf16.msra.mxu0 0
      %769 = vmatprep.subr.bf16.mxu0 0
      %770 = vmatpush1.bf16.msra.mxu0 0
      %771 = vmatprep.subr.bf16.mxu0 0
      %772 = vmatpush1.bf16.msra.mxu0 0
      %773 = vmatprep.subr.bf16.mxu0 0
      %774 = vmatpush1.bf16.msra.mxu0 0
      %775 = vmatprep.subr.bf16.mxu0 0
      %776 = vmatpush1.bf16.msra.mxu0 0
      %777 = vmatprep.subr.bf16.mxu0 0
      %778 = vmatpush1.bf16.msra.mxu0 0
      %779 = vmatprep.subr.bf16.mxu0 0
      %780 = vmatpush1.bf16.msra.mxu0 0
      %781 = vmatprep.subr.bf16.mxu0 0
      %782 = vmatpush1.bf16.msra.mxu0 0
      %783 = vmatprep.subr.bf16.mxu0 0
      %784 = vmatpush1.bf16.msra.mxu0 0
      %785 = vmatprep.subr.bf16.mxu0 0
      %786 = vmatpush1.bf16.msra.mxu0 0
      %787 = vmatprep.subr.bf16.mxu0 0
      %788 = vmatpush1.bf16.msra.mxu0 0
      %789 = vmatprep.mubr.bf16.mxu0 0
      %790 = vmatmul.mubr.bf16.gmra.mrb[0].mxu0 %v714
      %v791 = vpop.f32.mrb[0].mxu0
      %v792 = vadd.f32 0.0, %v791
      %v793 = vpop.f32.mrb[0].mxu0
      %v794 = vpop.f32.mrb[0].mxu0
      %v795 = vpop.f32.mrb[0].mxu0
      %796 = vdwg.mxu0
      %v797 = vmul.f32 %v751, %v242
      %v798 = vmul.f32 %v753, %v243
      %v799 = vmul.f32 %v792, %v244
      %v800 = vadd.f32 %v609, %v797
      %v801 = vadd.f32 %v610, %v798
      %v802 = vadd.f32 %v611, %v799
      %v803 = vmul.f32 %v797, %v797
      %v804 = vmul.f32 %v798, %v798
      %v805 = vmul.f32 %v799, %v799
      %v806 = vadd.f32 %v615, %v803
      %v807 = vadd.f32 %v616, %v804
      %v808 = vadd.f32 %v617, %v805
      %s809 = scalar_lea.vmem %s182, 48
      %810 = vst [vmem:[%s809] sm:$0xff] %v797
      %811 = vst [vmem:[%s809 + $0x8] sm:$0xff] %v798
      %812 = vst.msk [vmem:[%s809 + $0x10] sm:$0xff] %vm429, %v799
      %v813 = vld [vmem:[%s169] sm:$0x3f]
      %v815 = vcombine.high %v813, %v813
      %v817 = vunpack.c.l.s4 1983009808
      %v818 = vunpack.c.0.s8 %v817
      %v819 = vlaneseq
      %v820 = vshrl.u32 %v819, 7
      %v821 = vsub.s32 %v818, %v820
      %v822 = vrot.slane %v813, %v821
      %v824 = vunpack.c.l.s4 1983009808
      %v825 = vunpack.c.0.s8 %v824
      %v826 = vlaneseq
      %v827 = vshrl.u32 %v826, 7
      %v828 = vsub.s32 %v825, %v827
      %v829 = vrot.slane %v815, %v828
      %v830 = vcombine.high %v822, %v822
      %v831 = vcombine.low %v813, %v813
      %v833 = vunpack.c.l.s4 1983009808
      %v834 = vunpack.c.0.s8 %v833
      %v835 = vlaneseq
      %v836 = vshrl.u32 %v835, 7
      %v837 = vsub.s32 %v834, %v836
      %v838 = vrot.slane %v831, %v837
      %v839 = vcombine.high %v838, %v838
      %840 = vrot.lane.b32.xlu0 %v838, 127
      %v841 = vpop.permute.xlu0 %840
      %842 = vrot.lane.b32.xlu0 %v839, 127
      %v843 = vpop.permute.xlu0 %842
      %844 = vrot.lane.b32.xlu0 %v822, 127
      %v845 = vpop.permute.xlu0 %844
      %v846 = vsel %vm278, %v841, %v843
      %v847 = vsel %vm278, %v843, %v845
      %v848 = vcombine.low %v822, %v822
      %v849 = vcombine.low %v829, %v829
      %850 = vrot.lane.b32.xlu0 %v848, 110
      %v851 = vpop.permute.xlu0 %850
      %852 = vrot.lane.b32.xlu0 %v822, 110
      %v853 = vpop.permute.xlu0 %852
      %854 = vrot.lane.b32.xlu0 %v849, 110
      %v855 = vpop.permute.xlu0 %854
      %v856 = vsel %vm289, %v851, %v853
      %v857 = vsel %vm289, %v853, %v855
      %v858 = vcombine.low %v838, %v838
      %859 = vrot.lane.b32.xlu0 %v858, 109
      %v860 = vpop.permute.xlu0 %859
      %861 = vrot.lane.b32.xlu0 %v838, 109
      %v862 = vpop.permute.xlu0 %861
      %863 = vrot.lane.b32.xlu0 %v848, 109
      %v864 = vpop.permute.xlu0 %863
      %v865 = vsel %vm299, %v860, %v862
      %v866 = vsel %vm299, %v862, %v864
      %v869 = vsel %vm302, %v822, %v846
      %v872 = vsel %vm302, %v830, %v847
      %v875 = vsel %vm302, %v829, %v845
      %v877 = vsel %vm312, %v869, %v856
      %v879 = vsel %vm312, %v872, %v857
      %v881 = vsel %vm312, %v875, %v855
      %v883 = vsel %vm319, %v877, %v865
      %v885 = vsel %vm319, %v879, %v866
      %v887 = vsel %vm319, %v881, %v864
      %s888 = scalar_lea.vmem %s173, 12
      %v889 = vld [vmem:[%s888] sm:$0xf]
      %893 = vrot.lane.b32.xlu0 %v883, 109
      %v894 = vpop.permute.xlu0 %893
      %895 = vrot.lane.b32.xlu0 %v885, 109
      %v896 = vpop.permute.xlu0 %895
      %897 = vrot.lane.b32.xlu0 %v887, 109
      %v898 = vpop.permute.xlu0 %897
      %v899 = vsel %vm299, %v894, %v896
      %v900 = vsel %vm299, %v896, %v898
      %v905 = vsel %vm330, %v889, 0
      %907 = vmatprep.subr.bf16.mxu0 %v900
      %908 = vmatpush1.bf16.msra.mxu0 %v899
      %909 = vmatprep.subr.bf16.mxu0 0
      %910 = vmatpush1.bf16.msra.mxu0 0
      %911 = vmatprep.subr.bf16.mxu0 0
      %912 = vmatpush1.bf16.msra.mxu0 0
      %913 = vmatprep.subr.bf16.mxu0 0
      %914 = vmatpush1.bf16.msra.mxu0 0
      %915 = vmatprep.subr.bf16.mxu0 0
      %916 = vmatpush1.bf16.msra.mxu0 0
      %917 = vmatprep.subr.bf16.mxu0 0
      %918 = vmatpush1.bf16.msra.mxu0 0
      %919 = vmatprep.subr.bf16.mxu0 0
      %920 = vmatpush1.bf16.msra.mxu0 0
      %921 = vmatprep.subr.bf16.mxu0 0
      %922 = vmatpush1.bf16.msra.mxu0 0
      %923 = vmatprep.subr.bf16.mxu0 0
      %924 = vmatpush1.bf16.msra.mxu0 0
      %925 = vmatprep.subr.bf16.mxu0 0
      %926 = vmatpush1.bf16.msra.mxu0 0
      %927 = vmatprep.subr.bf16.mxu0 0
      %928 = vmatpush1.bf16.msra.mxu0 0
      %929 = vmatprep.subr.bf16.mxu0 0
      %930 = vmatpush1.bf16.msra.mxu0 0
      %931 = vmatprep.subr.bf16.mxu0 0
      %932 = vmatpush1.bf16.msra.mxu0 0
      %933 = vmatprep.subr.bf16.mxu0 0
      %934 = vmatpush1.bf16.msra.mxu0 0
      %935 = vmatprep.subr.bf16.mxu0 0
      %936 = vmatpush1.bf16.msra.mxu0 0
      %937 = vmatprep.subr.bf16.mxu0 0
      %938 = vmatpush1.bf16.msra.mxu0 0
      %939 = vmatprep.mubr.bf16.mxu0 0
      %940 = vmatmul.mubr.bf16.gmra.mrb[0].mxu0 %v905
      %v941 = vpop.f32.mrb[0].mxu0
      %v942 = vadd.f32 0.0, %v941
      %v943 = vpop.f32.mrb[0].mxu0
      %v944 = vadd.f32 0.0, %v943
      %v945 = vpop.f32.mrb[0].mxu0
      %v946 = vpop.f32.mrb[0].mxu0
      %947 = vdwg.mxu0
      %948 = vmatprep.subr.bf16.mxu0 0
      %949 = vmatpush1.bf16.msra.mxu0 %v898
      %950 = vmatprep.subr.bf16.mxu0 0
      %951 = vmatpush1.bf16.msra.mxu0 0
      %952 = vmatprep.subr.bf16.mxu0 0
      %953 = vmatpush1.bf16.msra.mxu0 0
      %954 = vmatprep.subr.bf16.mxu0 0
      %955 = vmatpush1.bf16.msra.mxu0 0
      %956 = vmatprep.subr.bf16.mxu0 0
      %957 = vmatpush1.bf16.msra.mxu0 0
      %958 = vmatprep.subr.bf16.mxu0 0
      %959 = vmatpush1.bf16.msra.mxu0 0
      %960 = vmatprep.subr.bf16.mxu0 0
      %961 = vmatpush1.bf16.msra.mxu0 0
      %962 = vmatprep.subr.bf16.mxu0 0
      %963 = vmatpush1.bf16.msra.mxu0 0
      %964 = vmatprep.subr.bf16.mxu0 0
      %965 = vmatpush1.bf16.msra.mxu0 0
      %966 = vmatprep.subr.bf16.mxu0 0
      %967 = vmatpush1.bf16.msra.mxu0 0
      %968 = vmatprep.subr.bf16.mxu0 0
      %969 = vmatpush1.bf16.msra.mxu0 0
      %970 = vmatprep.subr.bf16.mxu0 0
      %971 = vmatpush1.bf16.msra.mxu0 0
      %972 = vmatprep.subr.bf16.mxu0 0
      %973 = vmatpush1.bf16.msra.mxu0 0
      %974 = vmatprep.subr.bf16.mxu0 0
      %975 = vmatpush1.bf16.msra.mxu0 0
      %976 = vmatprep.subr.bf16.mxu0 0
      %977 = vmatpush1.bf16.msra.mxu0 0
      %978 = vmatprep.subr.bf16.mxu0 0
      %979 = vmatpush1.bf16.msra.mxu0 0
      %980 = vmatprep.mubr.bf16.mxu0 0
      %981 = vmatmul.mubr.bf16.gmra.mrb[0].mxu0 %v905
      %v982 = vpop.f32.mrb[0].mxu0
      %v983 = vadd.f32 0.0, %v982
      %v984 = vpop.f32.mrb[0].mxu0
      %v985 = vpop.f32.mrb[0].mxu0
      %v986 = vpop.f32.mrb[0].mxu0
      %987 = vdwg.mxu0
      %v988 = vmul.f32 %v942, %v242
      %v989 = vmul.f32 %v944, %v243
      %v990 = vmul.f32 %v983, %v244
      %v991 = vadd.f32 %v800, %v988
      %v992 = vadd.f32 %v801, %v989
      %v993 = vadd.f32 %v802, %v990
      %v994 = vmul.f32 %v988, %v988
      %v995 = vmul.f32 %v989, %v989
      %v996 = vmul.f32 %v990, %v990
      %v997 = vadd.f32 %v806, %v994
      %v998 = vadd.f32 %v807, %v995
      %v999 = vadd.f32 %v808, %v996
      %s1000 = scalar_lea.vmem %s182, 72
      %1001 = vst [vmem:[%s1000] sm:$0xff] %v988
      %1002 = vst [vmem:[%s1000 + $0x8] sm:$0xff] %v989
      %1003 = vst.msk [vmem:[%s1000 + $0x10] sm:$0xff] %vm429, %v990
      %v1004 = vadd.f32 %v991, %v992
      %v1005 = vsel %vm429, %v993, 0.0
      %v1006 = vadd.f32 %v1004, %v1005
      %1007 = vadd.xlane.f32.xlu0 %v1006
      %v1008 = vpop.xlane.xlu0 %1007
      %v1009 = vmul.f32 %v1008, 0.0009765625
      %v1010 = vadd.f32 %v997, %v998
      %v1011 = vsel %vm429, %v999, 0.0
      %v1012 = vadd.f32 %v1010, %v1011
      %1013 = vadd.xlane.f32.xlu0 %v1012
      %v1014 = vpop.xlane.xlu0 %1013
      %v1015 = vmul.f32 %v1014, 0.0009765625
      %v1016 = vmul.f32 %v1009, %v1009
      %v1017 = vsub.f32 %v1015, %v1016
      %v1018 = vmax.f32 %v1017, 0.0
      %v1019 = vadd.f32 %v1018, 1e-05
      %v1020 = vrsqrt.pop %v1019
      %v1021 = vld [vmem:[%s182] sm:$0xff]
      %v1022 = vld [vmem:[%s182 + $0x8] sm:$0xff]
      %v1023 = vld [vmem:[%s182 + $0x10] sm:$0xff]
      %v1024 = vsub.f32 %v1021, %v1009
      %v1025 = vsub.f32 %v1022, %v1009
      %v1026 = vsub.f32 %v1023, %v1009
      %v1027 = vmul.f32 %v1024, %v1020
      %v1028 = vmul.f32 %v1025, %v1020
      %v1029 = vmul.f32 %v1026, %v1020
      %v1030 = vmax.f32 %v1027, 0.0
      %v1031 = vmax.f32 %v1028, 0.0
      %v1032 = vmax.f32 %v1029, 0.0
      %1033 = vst [vmem:[%s182] sm:$0xff] %v1030
      %1034 = vst [vmem:[%s182 + $0x8] sm:$0xff] %v1031
      %1035 = vst.msk [vmem:[%s182 + $0x10] sm:$0xff] %vm429, %v1032
      %v1036 = vld [vmem:[%s618] sm:$0xff]
      %v1037 = vld [vmem:[%s618 + $0x8] sm:$0xff]
      %v1038 = vld [vmem:[%s618 + $0x10] sm:$0xff]
      %v1039 = vsub.f32 %v1036, %v1009
      %v1040 = vsub.f32 %v1037, %v1009
      %v1041 = vsub.f32 %v1038, %v1009
      %v1042 = vmul.f32 %v1039, %v1020
      %v1043 = vmul.f32 %v1040, %v1020
      %v1044 = vmul.f32 %v1041, %v1020
      %v1045 = vmax.f32 %v1042, 0.0
      %v1046 = vmax.f32 %v1043, 0.0
      %v1047 = vmax.f32 %v1044, 0.0
      %1048 = vst [vmem:[%s618] sm:$0xff] %v1045
      %1049 = vst [vmem:[%s618 + $0x8] sm:$0xff] %v1046
      %1050 = vst.msk [vmem:[%s618 + $0x10] sm:$0xff] %vm429, %v1047
      %v1051 = vld [vmem:[%s809] sm:$0xff]
      %v1052 = vld [vmem:[%s809 + $0x8] sm:$0xff]
      %v1053 = vld [vmem:[%s809 + $0x10] sm:$0xff]
      %v1054 = vsub.f32 %v1051, %v1009
      %v1055 = vsub.f32 %v1052, %v1009
      %v1056 = vsub.f32 %v1053, %v1009
      %v1057 = vmul.f32 %v1054, %v1020
      %v1058 = vmul.f32 %v1055, %v1020
      %v1059 = vmul.f32 %v1056, %v1020
      %v1060 = vmax.f32 %v1057, 0.0
      %v1061 = vmax.f32 %v1058, 0.0
      %v1062 = vmax.f32 %v1059, 0.0
      %1063 = vst [vmem:[%s809] sm:$0xff] %v1060
      %1064 = vst [vmem:[%s809 + $0x8] sm:$0xff] %v1061
      %1065 = vst.msk [vmem:[%s809 + $0x10] sm:$0xff] %vm429, %v1062
      %v1066 = vld [vmem:[%s1000] sm:$0xff]
      %v1067 = vld [vmem:[%s1000 + $0x8] sm:$0xff]
      %v1068 = vld [vmem:[%s1000 + $0x10] sm:$0xff]
      %v1069 = vsub.f32 %v1066, %v1009
      %v1070 = vsub.f32 %v1067, %v1009
      %v1071 = vsub.f32 %v1068, %v1009
      %v1072 = vmul.f32 %v1069, %v1020
      %v1073 = vmul.f32 %v1070, %v1020
      %v1074 = vmul.f32 %v1071, %v1020
      %v1075 = vmax.f32 %v1072, 0.0
      %v1076 = vmax.f32 %v1073, 0.0
      %v1077 = vmax.f32 %v1074, 0.0
      %1078 = vst [vmem:[%s1000] sm:$0xff] %v1075
      %1079 = vst [vmem:[%s1000 + $0x8] sm:$0xff] %v1076
      %1080 = vst.msk [vmem:[%s1000 + $0x10] sm:$0xff] %vm429, %v1077
      %p1081 = scmp.lt.s32.totalorder %s17, 1
      %s1082 = scalar_select %p1081, %s17, 1
      %p1083 = scmp.lt.s32.totalorder %s18, 0
      %s1084 = scalar_select %p1083, %s18, 0
      %s1085 = smul.addr %s1084, 3
      %s1086 = smul.addr %s1082, 12
      %s1087 = sadd.s32 %s1085, %s1086
      %s1088 = smul.addr %s1087, 8
      %s1089 = scalar_lea.vmem %s2, %s1088
      // Predicated region
      $region29: #{unet_up_forward.1} parent=27 // pred_check
        %p1090 = pneg %p97
      $region30: #{unet_up_forward.1} parent=27 // pred_check_branch
        %1092 = sbr.rel (%p1090) target = $region32
      $region31: #{unet_up_forward.1} parent=27 // pred_region
        _
      $region32: #{unet_up_forward.1} parent=27 // pred_fallthru
        _
    $region28: #{unet_up_forward.1} parent=5 // pred_fallthru
      _
    %p1093 = scmp.le.s32.totalorder 2, %s8
    // Predicated region
    $region33: #{unet_up_forward.1} parent=5 // pred_check
      %p1094 = pneg %p1093
    $region34: #{unet_up_forward.1} parent=5 // pred_check_branch
      %1096 = sbr.rel (%p1094) target = $region36
    $region35: #{unet_up_forward.1} parent=5 // pred_region
      %s1097 = ssub.s32 %s8, 2
      // Predicated region
      $region37: #{unet_up_forward.1} parent=35 // pred_check
        %p1098 = pneg %p103
      $region38: #{unet_up_forward.1} parent=35 // pred_check_branch
        %1100 = sbr.rel (%p1098) target = $region40
      $region39: #{unet_up_forward.1} parent=35 // pred_region
        %p1101 = scmp.lt.s32.totalorder %s19, 1
        %s1102 = scalar_select %p1101, %s19, 1
        %p1103 = scmp.lt.s32.totalorder %s20, 0
        %s1104 = scalar_select %p1103, %s20, 0
        %s1105 = smul.addr %s1104, 3
        %s1106 = smul.addr %s1102, 12
        %s1107 = sadd.s32 %s1105, %s1106
        %s1108 = smul.addr %s1107, 8
        %s1109 = scalar_lea.vmem %s2, %s1108
      $region40: #{unet_up_forward.1} parent=35 // pred_fallthru
        _
    $region36: #{unet_up_forward.1} parent=5 // pred_fallthru
      _
  $region6: #{unet_up_forward.1} parent=0 // loop_footer
    %s12 = sadd.s32 1, %s8
  $region7: #{unet_up_forward.1} parent=0 // loop_footer_branch
    %7 = sbr.rel target = $region3
  $region8: #{unet_up_forward.1} parent=0 // loop_exit
    _

</llo_original>
